<compile_context>
chip_gen: v7x
topology: tpu7x:2x2x1
jax: 0.10.0
libtpu: 0.0.40
codegen_flags: <defaults>
</compile_context>

<pallas_src>
import jax
import jax.numpy as jnp
from jax.experimental import pallas as pl
from jax.experimental.pallas import tpu as pltpu

LANE = 128


def _round_up(n, m):
    return ((n + m - 1) // m) * m


def siamese_kernel(e1_ref, e2_ref,
                   w1_ref, b1_ref,
                   w2_ref, b2_ref,
                   w3_ref, b3_ref,
                   o_ref):
    # |e1 - e2| on the flattened, zero-padded embeddings                (TB, Dp)
    x = jnp.abs(e1_ref[...] - e2_ref[...])

    # hidden layer 1: relu(x @ W1 + b1)                                 (TB, H1p)
    h1 = jnp.dot(x, w1_ref[...], preferred_element_type=jnp.float32)
    h1 = jnp.maximum(h1 + b1_ref[...], 0.0)

    # hidden layer 2: relu(h1 @ W2 + b2)                                (TB, H2p)
    h2 = jnp.dot(h1, w2_ref[...], preferred_element_type=jnp.float32)
    h2 = jnp.maximum(h2 + b2_ref[...], 0.0)

    # output layer (width 1): VPU multiply + XLU lane reduction instead of an
    # N=1 MXU matmul. w3_ref is a zero-padded (1, H2p) row.             (TB, 1)
    z = jnp.sum(h2 * w3_ref[...], axis=-1, keepdims=True)

    # b3_ref is (1, 128) filled with the scalar bias: z + b3 broadcasts to
    # (TB, 128) so the final store is a full-lane, unmasked vst.
    o_ref[...] = jax.nn.sigmoid(z + b3_ref[...]).astype(o_ref.dtype)


def prepare_params(params, embedding_dim):
    """One-time prep: transpose PyTorch-layout (out,in) weights to (in,out) and
    zero-pad all widths to multiples of 128 lanes. Do NOT call per forward."""
    (w1, b1), (w2, b2), (w3, b3) = params
    h1, h2 = w1.shape[0], w2.shape[0]
    dp = _round_up(embedding_dim, LANE)
    h1p = _round_up(h1, LANE)
    h2p = _round_up(h2, LANE)

    w1t = jnp.zeros((dp, h1p), jnp.float32).at[:embedding_dim, :h1].set(w1.T)
    b1r = jnp.zeros((1, h1p), jnp.float32).at[0, :h1].set(b1)
    w2t = jnp.zeros((h1p, h2p), jnp.float32).at[:h1, :h2].set(w2.T)
    b2r = jnp.zeros((1, h2p), jnp.float32).at[0, :h2].set(b2)
    w3r = jnp.zeros((1, h2p), jnp.float32).at[0, :h2].set(w3[0])
    b3r = jnp.full((1, LANE), jnp.asarray(b3, jnp.float32)[0], jnp.float32)

    prepared = (w1t, b1r, w2t, b2r, w3r, b3r)
    dims = {"d": embedding_dim, "dp": dp, "h1p": h1p, "h2p": h2p}
    return prepared, dims


def siamese_forward(e1, e2, prepared, dims):
    """e1, e2: (B, ...) arrays; prepared/dims from prepare_params()."""
    w1t, b1r, w2t, b2r, w3r, b3r = prepared
    d, dp = dims["d"], dims["dp"]
    h1p, h2p = dims["h1p"], dims["h2p"]

    B = e1.shape[0]
    e1f = e1.reshape(B, -1).astype(jnp.float32)
    e2f = e2.reshape(B, -1).astype(jnp.float32)
    assert e1f.shape[1] == d and e2f.shape[1] == d

    # Batch tile: pad to sublane multiple; tile at 128 rows once B grows so the
    # embedding DMA pipelines against the matmuls while weights stay resident.
    tb = LANE if B > LANE else _round_up(B, 8)
    bp = _round_up(B, tb)
    pad = ((0, bp - B), (0, dp - d))
    e1p = jnp.pad(e1f, pad)
    e2p = jnp.pad(e2f, pad)

    grid = (bp // tb,)
    batch_spec = pl.BlockSpec((tb, dp), lambda i: (i, 0),
                              memory_space=pltpu.VMEM)
    resident = lambda shape: pl.BlockSpec(shape, lambda i: (0, 0),
                                          memory_space=pltpu.VMEM)

    flops = 2 * bp * (dp * h1p + h1p * h2p + h2p)
    bytes_accessed = 4 * (2 * bp * dp + dp * h1p + h1p * h2p
                          + 2 * h1p + 2 * h2p + LANE + bp * LANE)

    out = pl.pallas_call(
        siamese_kernel,
        out_shape=jax.ShapeDtypeStruct((bp, LANE), jnp.float32),
        grid=grid,
        in_specs=[batch_spec, batch_spec,
                  resident(w1t.shape), resident(b1r.shape),
                  resident(w2t.shape), resident(b2r.shape),
                  resident(w3r.shape), resident(b3r.shape)],
        out_specs=pl.BlockSpec((tb, LANE), lambda i: (i, 0),
                               memory_space=pltpu.VMEM),
        compiler_params=pltpu.CompilerParams(
            dimension_semantics=("parallel",)),
        cost_estimate=pl.CostEstimate(flops=flops,
                                      transcendentals=bp * LANE,
                                      bytes_accessed=bytes_accessed),
    )(e1p, e2p, w1t, b1r, w2t, b2r, w3r, b3r)

    # lane-dense slab -> (B, 1) result (column 0 holds the real output)
    return out[:B, :1]


def init_params(embedding_dim, hidden_dims, key):
    """Deterministic init matching nn.Linear shapes: W (out, in), b (out,)."""
    dims = [embedding_dim] + list(hidden_dims) + [1]
    params = []
    for i in range(len(dims) - 1):
        fan_in, fan_out = dims[i], dims[i + 1]
        key, kw, kb = jax.random.split(key, 3)
        bound = 1.0 / (fan_in ** 0.5)
        W = jax.random.uniform(kw, (fan_out, fan_in), jnp.float32, -bound, bound)
        b = jax.random.uniform(kb, (fan_out,), jnp.float32, -bound, bound)
        params.append((W, b))
    return params


if __name__ == "__main__":
    key = jax.random.PRNGKey(0)
    k1, k2, kp = jax.random.split(key, 3)

    # small shapes: batch=8, embeddings (B, 2, 64) -> flatten to D=128
    B, D = 8, 128
    hidden_dims = [64, 32]
    e1 = jax.random.normal(k1, (B, 2, 64), jnp.float32)
    e2 = jax.random.normal(k2, (B, 2, 64), jnp.float32)
    params = init_params(D, hidden_dims, kp)

    # one-time parameter prep (transpose + lane padding), then forward
    prepared, dims = prepare_params(params, D)
    out = siamese_forward(e1, e2, prepared, dims)
    jax.block_until_ready(out)

    # pure-JAX reference check against the ORIGINAL (unpadded) parameters
    x = jnp.abs(e1.reshape(B, -1) - e2.reshape(B, -1))
    for (W, b) in params[:-1]:
        x = jnp.maximum(x @ W.T + b, 0.0)
    Wl, bl = params[-1]
    ref = jax.nn.sigmoid(x @ Wl.T + bl)
    assert out.shape == (B, 1)
    assert jnp.allclose(out, ref, atol=1e-5), (out, ref)

    print("KERNEL_OK")
</pallas_src>

<mosaic_0001>
module attributes {stable_mosaic.version = 11 : i64} {
  func.func @siamese_kernel(%arg0: i32, %arg1: memref<8x128xf32, #tpu.memory_space<vmem>>, %arg2: memref<8x128xf32, #tpu.memory_space<vmem>>, %arg3: memref<128x128xf32, #tpu.memory_space<vmem>>, %arg4: memref<1x128xf32, #tpu.memory_space<vmem>>, %arg5: memref<128x128xf32, #tpu.memory_space<vmem>>, %arg6: memref<1x128xf32, #tpu.memory_space<vmem>>, %arg7: memref<1x128xf32, #tpu.memory_space<vmem>>, %arg8: memref<1x128xf32, #tpu.memory_space<vmem>>, %arg9: memref<8x128xf32, #tpu.memory_space<vmem>>) attributes {dimension_semantics = [#tpu.dimension_semantics<parallel>], iteration_bounds = array<i64: 1>, scalar_prefetch = 0 : i64, scratch_operands = 0 : i64, tpu.core_type = #tpu.core_type<tc>, window_params = [{transform_indices = @transform_0, window_bounds = array<i64: 8, 128>}, {transform_indices = @transform_1, window_bounds = array<i64: 8, 128>}, {pipeline_mode = #tpu.pipeline_mode<synchronous>, transform_indices = @transform_2, window_bounds = array<i64: 128, 128>}, {pipeline_mode = #tpu.pipeline_mode<synchronous>, transform_indices = @transform_3, window_bounds = array<i64: 1, 128>}, {pipeline_mode = #tpu.pipeline_mode<synchronous>, transform_indices = @transform_4, window_bounds = array<i64: 128, 128>}, {pipeline_mode = #tpu.pipeline_mode<synchronous>, transform_indices = @transform_5, window_bounds = array<i64: 1, 128>}, {pipeline_mode = #tpu.pipeline_mode<synchronous>, transform_indices = @transform_6, window_bounds = array<i64: 1, 128>}, {pipeline_mode = #tpu.pipeline_mode<synchronous>, transform_indices = @transform_7, window_bounds = array<i64: 1, 128>}, {transform_indices = @transform_8, window_bounds = array<i64: 8, 128>}]} {
    %c0 = arith.constant 0 : index
    %c0_0 = arith.constant 0 : index
    %0 = vector.load %arg1[%c0, %c0_0] : memref<8x128xf32, #tpu.memory_space<vmem>>, vector<8x128xf32>
    %c0_1 = arith.constant 0 : index
    %c0_2 = arith.constant 0 : index
    %1 = vector.load %arg2[%c0_1, %c0_2] : memref<8x128xf32, #tpu.memory_space<vmem>>, vector<8x128xf32>
    %2 = arith.subf %0, %1 : vector<8x128xf32>
    %3 = math.absf %2 : vector<8x128xf32>
    %c0_3 = arith.constant 0 : index
    %c0_4 = arith.constant 0 : index
    %4 = vector.load %arg3[%c0_3, %c0_4] : memref<128x128xf32, #tpu.memory_space<vmem>>, vector<128x128xf32>
    %cst = arith.constant dense<0.000000e+00> : vector<8x128xf32>
    %5 = tpu.matmul %3, %4, %cst {dimension_numbers = #tpu.dot_dimension_numbers<[1], [0], [0], [1], [0, 0, 1, 1], [], []>} : vector<8x128xf32>, vector<128x128xf32>, vector<8x128xf32> -> vector<8x128xf32>
    %c0_5 = arith.constant 0 : index
    %c0_6 = arith.constant 0 : index
    %6 = vector.load %arg4[%c0_5, %c0_6] : memref<1x128xf32, #tpu.memory_space<vmem>>, vector<1x128xf32>
    %7 = vector.broadcast %6 : vector<1x128xf32> to vector<8x128xf32>
    %8 = arith.addf %5, %7 : vector<8x128xf32>
    %cst_7 = arith.constant 0.000000e+00 : f32
    %9 = vector.broadcast %cst_7 : f32 to vector<8x128xf32>
    %10 = arith.maximumf %8, %9 : vector<8x128xf32>
    %c0_8 = arith.constant 0 : index
    %c0_9 = arith.constant 0 : index
    %11 = vector.load %arg5[%c0_8, %c0_9] : memref<128x128xf32, #tpu.memory_space<vmem>>, vector<128x128xf32>
    %cst_10 = arith.constant dense<0.000000e+00> : vector<8x128xf32>
    %12 = tpu.matmul %10, %11, %cst_10 {dimension_numbers = #tpu.dot_dimension_numbers<[1], [0], [0], [1], [0, 0, 1, 1], [], []>} : vector<8x128xf32>, vector<128x128xf32>, vector<8x128xf32> -> vector<8x128xf32>
    %c0_11 = arith.constant 0 : index
    %c0_12 = arith.constant 0 : index
    %13 = vector.load %arg6[%c0_11, %c0_12] : memref<1x128xf32, #tpu.memory_space<vmem>>, vector<1x128xf32>
    %14 = vector.broadcast %13 : vector<1x128xf32> to vector<8x128xf32>
    %15 = arith.addf %12, %14 : vector<8x128xf32>
    %cst_13 = arith.constant 0.000000e+00 : f32
    %16 = vector.broadcast %cst_13 : f32 to vector<8x128xf32>
    %17 = arith.maximumf %15, %16 : vector<8x128xf32>
    %c0_14 = arith.constant 0 : index
    %c0_15 = arith.constant 0 : index
    %18 = vector.load %arg7[%c0_14, %c0_15] : memref<1x128xf32, #tpu.memory_space<vmem>>, vector<1x128xf32>
    %19 = vector.broadcast %18 : vector<1x128xf32> to vector<8x128xf32>
    %20 = arith.mulf %17, %19 : vector<8x128xf32>
    %cst_16 = arith.constant dense<0.000000e+00> : vector<8xf32>
    %21 = vector.multi_reduction <add>, %20, %cst_16 [1] : vector<8x128xf32> to vector<8xf32>
    %22 = vector.shape_cast %21 : vector<8xf32> to vector<8x1xf32>
    %c0_17 = arith.constant 0 : index
    %c0_18 = arith.constant 0 : index
    %23 = vector.load %arg8[%c0_17, %c0_18] : memref<1x128xf32, #tpu.memory_space<vmem>>, vector<1x128xf32>
    %24 = vector.broadcast %22 : vector<8x1xf32> to vector<8x128xf32>
    %25 = vector.broadcast %23 : vector<1x128xf32> to vector<8x128xf32>
    %26 = arith.addf %24, %25 : vector<8x128xf32>
    %27 = arith.negf %26 : vector<8x128xf32>
    %28 = math.exp %27 : vector<8x128xf32>
    %cst_19 = arith.constant 1.000000e+00 : f32
    %29 = vector.broadcast %cst_19 : f32 to vector<8x128xf32>
    %30 = arith.addf %29, %28 : vector<8x128xf32>
    %31 = arith.divf %29, %30 : vector<8x128xf32>
    %c0_20 = arith.constant 0 : index
    %c0_21 = arith.constant 0 : index
    %32 = vector.load %arg9[%c0_20, %c0_21] : memref<8x128xf32, #tpu.memory_space<vmem>>, vector<8x128xf32>
    tpu.vector_store %arg9[%c0_20, %c0_21], %31 {strides = array<i32>} : memref<8x128xf32, #tpu.memory_space<vmem>>, vector<8x128xf32>,
    return
  }
  func.func @transform_0(%arg0: i32) -> (i32, i32) {
    %c0_i32 = arith.constant 0 : i32
    %c0_i32_0 = arith.constant 0 : i32
    return %arg0, %c0_i32 : i32, i32
  }
  func.func @transform_1(%arg0: i32) -> (i32, i32) {
    %c0_i32 = arith.constant 0 : i32
    %c0_i32_0 = arith.constant 0 : i32
    return %arg0, %c0_i32 : i32, i32
  }
  func.func @transform_2(%arg0: i32) -> (i32, i32) {
    %c0_i32 = arith.constant 0 : i32
    %c0_i32_0 = arith.constant 0 : i32
    %c0_i32_1 = arith.constant 0 : i32
    return %c0_i32, %c0_i32_0 : i32, i32
  }
  func.func @transform_3(%arg0: i32) -> (i32, i32) {
    %c0_i32 = arith.constant 0 : i32
    %c0_i32_0 = arith.constant 0 : i32
    %c0_i32_1 = arith.constant 0 : i32
    return %c0_i32, %c0_i32_0 : i32, i32
  }
  func.func @transform_4(%arg0: i32) -> (i32, i32) {
    %c0_i32 = arith.constant 0 : i32
    %c0_i32_0 = arith.constant 0 : i32
    %c0_i32_1 = arith.constant 0 : i32
    return %c0_i32, %c0_i32_0 : i32, i32
  }
  func.func @transform_5(%arg0: i32) -> (i32, i32) {
    %c0_i32 = arith.constant 0 : i32
    %c0_i32_0 = arith.constant 0 : i32
    %c0_i32_1 = arith.constant 0 : i32
    return %c0_i32, %c0_i32_0 : i32, i32
  }
  func.func @transform_6(%arg0: i32) -> (i32, i32) {
    %c0_i32 = arith.constant 0 : i32
    %c0_i32_0 = arith.constant 0 : i32
    %c0_i32_1 = arith.constant 0 : i32
    return %c0_i32, %c0_i32_0 : i32, i32
  }
  func.func @transform_7(%arg0: i32) -> (i32, i32) {
    %c0_i32 = arith.constant 0 : i32
    %c0_i32_0 = arith.constant 0 : i32
    %c0_i32_1 = arith.constant 0 : i32
    return %c0_i32, %c0_i32_0 : i32, i32
  }
  func.func @transform_8(%arg0: i32) -> (i32, i32) {
    %c0_i32 = arith.constant 0 : i32
    %c0_i32_0 = arith.constant 0 : i32
    return %arg0, %c0_i32 : i32, i32
  }
}

</mosaic_0001>

<llo_original>
// kernel: tpu_custom_call.1
$region0: #{tpu_custom_call.1}
  #allocation0 [shape = 'u32[]', space=smem, size = 0x4, offset = 0x4, fixed_abs, tag = 'smem constant byte address 0x4 - core index']
  #allocation1 [shape = 'u32[144,128]{1,0:T(1,128)}', space=vmem, size = 0x12000, scoped, tag = 'internal scratch']
  %s0 = inlined_call_operand.hbm [shape: f32[8,128], index: 0, kind: input, shape index: {}]
  %s1 = inlined_call_operand.hbm [shape: f32[8,128], index: 1, kind: input, shape index: {}]
  %s2 = inlined_call_operand.hbm [shape: f32[128,128], index: 2, kind: input, shape index: {}]
  %s3 = inlined_call_operand.vmem [shape: f32[1,128], index: 3, kind: input, shape index: {}]
  %s4 = inlined_call_operand.hbm [shape: f32[128,128], index: 4, kind: input, shape index: {}]
  %s5 = inlined_call_operand.vmem [shape: f32[1,128], index: 5, kind: input, shape index: {}]
  %s6 = inlined_call_operand.vmem [shape: f32[1,128], index: 6, kind: input, shape index: {}]
  %s7 = inlined_call_operand.vmem [shape: f32[1,128], index: 7, kind: input, shape index: {}]
  %s8 = inlined_call_operand.hbm [shape: f32[8,128], index: 8, kind: output, shape index: {}]
  %s9 = sld [smem:[#allocation0]]
  $region58: #{tpu_custom_call.1} parent=0
    _
  %s11 = ssub.s32 1, %s9
  %s12 = scalar_select 0, %s11, %s9
  $region1: #{tpu_custom_call.1} parent=0
    #allocation2 [shape = 'u8[4096]{0}', space=vmem, size = 0x1000, scoped, tag = 'input window, operand 0, single buffered']
    #allocation3 [shape = 's32[1]{0}', space=sflag, size = 0x4, scoped, tag = 'scoped memory for tpu_custom_call.1']
    #allocation4 [shape = 's32[1]{0}', space=sflag, size = 0x4, scoped, tag = 'scoped memory for tpu_custom_call.1']
    #allocation5 [shape = 'u8[4096]{0}', space=vmem, size = 0x1000, scoped, tag = 'input window, operand 1, single buffered']
    #allocation6 [shape = 's32[1]{0}', space=sflag, size = 0x4, scoped, tag = 'scoped memory for tpu_custom_call.1']
    #allocation7 [shape = 'u8[65536]{0}', space=vmem, size = 0x10000, scoped, tag = 'input window, operand 2, single buffered']
    #allocation8 [shape = 'u8[65536]{0}', space=vmem, size = 0x10000, scoped, tag = 'input window, operand 4, single buffered']
    #allocation9 [shape = 's32[1]{0}', space=sflag, size = 0x4, scoped, tag = 'scoped memory for tpu_custom_call.1']
    #allocation10 [shape = 'u8[4096]{0}', space=vmem, size = 0x1000, scoped, tag = 'output window, operand 0, single buffered']
    %13 = vsyncpa [#allocation3], 0
    %14 = vsyncpa [#allocation6], 0
    %15 = vsyncpa [#allocation9], 0
    %16 = vsyncpa [#allocation4], 0
    // Predicated region
    $region2: #{tpu_custom_call.1} parent=1 // pred_check
      _
    $region3: #{tpu_custom_call.1} parent=1 // pred_check_branch
      %18 = sbr.rel (0) target = $region5
    $region4: #{tpu_custom_call.1} parent=1 // pred_region
      %s20 = ssub.s32 128, 128
      %21 = vsyncadd [#allocation3], %s20
      %s23 = sshll.u32 [#allocation2], 4
      %s24 = int_to_ptr.vmem [resolvable:$true] %s23
      %26 = dma.hbm_to_vmem [thread:$0]  %s0, 128, %s24, [#allocation3]
    $region5: #{tpu_custom_call.1} parent=1 // pred_fallthru
      _
    // Predicated region
    $region6: #{tpu_custom_call.1} parent=1 // pred_check
      _
    $region7: #{tpu_custom_call.1} parent=1 // pred_check_branch
      %28 = sbr.rel (0) target = $region9
    $region8: #{tpu_custom_call.1} parent=1 // pred_region
      %s30 = ssub.s32 128, 128
      %31 = vsyncadd [#allocation6], %s30
      %s33 = sshll.u32 [#allocation5], 4
      %s34 = int_to_ptr.vmem [resolvable:$true] %s33
      %36 = dma.hbm_to_vmem [thread:$0]  %s1, 128, %s34, [#allocation6]
    $region9: #{tpu_custom_call.1} parent=1 // pred_fallthru
      _
    // Predicated region
    $region10: #{tpu_custom_call.1} parent=1 // pred_check
      _
    $region11: #{tpu_custom_call.1} parent=1 // pred_check_branch
      %38 = sbr.rel (0) target = $region13
    $region12: #{tpu_custom_call.1} parent=1 // pred_region
      %s40 = ssub.s32 2048, 2048
      %41 = vsyncadd [#allocation6], %s40
      %s42 = sshll.u32 [#allocation7], 4
      %s43 = int_to_ptr.vmem [resolvable:$true] %s42
      %48 = dma.hbm_to_vmem [thread:$0]  %s2, 2048, %s43, [#allocation6], 128, 128, 8
    $region13: #{tpu_custom_call.1} parent=1 // pred_fallthru
      _
    // Predicated region
    $region14: #{tpu_custom_call.1} parent=1 // pred_check
      _
    $region15: #{tpu_custom_call.1} parent=1 // pred_check_branch
      %50 = sbr.rel (0) target = $region17
    $region16: #{tpu_custom_call.1} parent=1 // pred_region
      _
    $region17: #{tpu_custom_call.1} parent=1 // pred_fallthru
      _
    // Predicated region
    $region18: #{tpu_custom_call.1} parent=1 // pred_check
      _
    $region19: #{tpu_custom_call.1} parent=1 // pred_check_branch
      %52 = sbr.rel (0) target = $region21
    $region20: #{tpu_custom_call.1} parent=1 // pred_region
      %s54 = ssub.s32 2048, 2048
      %55 = vsyncadd [#allocation9], %s54
      %s56 = sshll.u32 [#allocation8], 4
      %s57 = int_to_ptr.vmem [resolvable:$true] %s56
      %62 = dma.hbm_to_vmem [thread:$0]  %s4, 2048, %s57, [#allocation9], 128, 128, 8
    $region21: #{tpu_custom_call.1} parent=1 // pred_fallthru
      _
    // Predicated region
    $region22: #{tpu_custom_call.1} parent=1 // pred_check
      _
    $region23: #{tpu_custom_call.1} parent=1 // pred_check_branch
      %64 = sbr.rel (0) target = $region25
    $region24: #{tpu_custom_call.1} parent=1 // pred_region
      _
    $region25: #{tpu_custom_call.1} parent=1 // pred_fallthru
      _
    // Predicated region
    $region26: #{tpu_custom_call.1} parent=1 // pred_check
      _
    $region27: #{tpu_custom_call.1} parent=1 // pred_check_branch
      %66 = sbr.rel (0) target = $region29
    $region28: #{tpu_custom_call.1} parent=1 // pred_region
      _
    $region29: #{tpu_custom_call.1} parent=1 // pred_fallthru
      _
    // Predicated region
    $region30: #{tpu_custom_call.1} parent=1 // pred_check
      _
    $region31: #{tpu_custom_call.1} parent=1 // pred_check_branch
      %68 = sbr.rel (0) target = $region33
    $region32: #{tpu_custom_call.1} parent=1 // pred_region
      _
    $region33: #{tpu_custom_call.1} parent=1 // pred_fallthru
      _
    // Predicated region
    $region34: #{tpu_custom_call.1} parent=1 // pred_check
      _
    $region35: #{tpu_custom_call.1} parent=1 // pred_check_branch
      %70 = sbr.rel (0) target = $region37
    $region36: #{tpu_custom_call.1} parent=1 // pred_region
      %71 = dma.done [#allocation3], 128
    $region37: #{tpu_custom_call.1} parent=1 // pred_fallthru
      _
    // Predicated region
    $region38: #{tpu_custom_call.1} parent=1 // pred_check
      _
    $region39: #{tpu_custom_call.1} parent=1 // pred_check_branch
      %73 = sbr.rel (0) target = $region41
    $region40: #{tpu_custom_call.1} parent=1 // pred_region
      %74 = dma.done [#allocation6], 128
    $region41: #{tpu_custom_call.1} parent=1 // pred_fallthru
      _
    // Predicated region
    $region42: #{tpu_custom_call.1} parent=1 // pred_check
      _
    $region43: #{tpu_custom_call.1} parent=1 // pred_check_branch
      %76 = sbr.rel (0) target = $region45
    $region44: #{tpu_custom_call.1} parent=1 // pred_region
      %77 = dma.done [#allocation6], 2048
    $region45: #{tpu_custom_call.1} parent=1 // pred_fallthru
      _
    // Predicated region
    $region46: #{tpu_custom_call.1} parent=1 // pred_check
      _
    $region47: #{tpu_custom_call.1} parent=1 // pred_check_branch
      %79 = sbr.rel (0) target = $region49
    $region48: #{tpu_custom_call.1} parent=1 // pred_region
      %80 = dma.done [#allocation9], 2048
    $region49: #{tpu_custom_call.1} parent=1 // pred_fallthru
      _
    %v81 = vld [vmem:[#allocation2] sm:$0xff]
    %v82 = vld [vmem:[#allocation5] sm:$0xff]
    %v83 = vsub.f32 %v81, %v82
    %v84 = vand.u32 2147483647, %v83
    %v85 = vld [vmem:[#allocation7] sm:$0xff]
    %v86 = vld [vmem:[#allocation7 + $0x8] sm:$0xff]
    %v87 = vld [vmem:[#allocation7 + $0x10] sm:$0xff]
    %v88 = vld [vmem:[#allocation7 + $0x18] sm:$0xff]
    %v89 = vld [vmem:[#allocation7 + $0x20] sm:$0xff]
    %v90 = vld [vmem:[#allocation7 + $0x28] sm:$0xff]
    %v91 = vld [vmem:[#allocation7 + $0x30] sm:$0xff]
    %v92 = vld [vmem:[#allocation7 + $0x38] sm:$0xff]
    %v93 = vld [vmem:[#allocation7 + $0x40] sm:$0xff]
    %v94 = vld [vmem:[#allocation7 + $0x48] sm:$0xff]
    %v95 = vld [vmem:[#allocation7 + $0x50] sm:$0xff]
    %v96 = vld [vmem:[#allocation7 + $0x58] sm:$0xff]
    %v97 = vld [vmem:[#allocation7 + $0x60] sm:$0xff]
    %v98 = vld [vmem:[#allocation7 + $0x68] sm:$0xff]
    %v99 = vld [vmem:[#allocation7 + $0x70] sm:$0xff]
    %v100 = vld [vmem:[#allocation7 + $0x78] sm:$0xff]
    %v101 = vld [vmem:[%s3] sm:$0x1]
    %v103 = vlaneseq
    %v104 = vshrl.u32 %v103, 7
    %v105 = vsub.s32 0, %v104
    %v106 = vrot.slane %v101, %v105
    %108 = vmatprep.subr.mxu0 0.0
    %109 = vmatpush1.msra.mxu0 %v85
    %110 = vmatprep.subr.mxu0 0.0
    %111 = vmatpush1.msra.mxu0 %v86
    %112 = vmatprep.subr.mxu0 0.0
    %113 = vmatpush1.msra.mxu0 %v87
    %114 = vmatprep.subr.mxu0 0.0
    %115 = vmatpush1.msra.mxu0 %v88
    %116 = vmatprep.subr.mxu0 0.0
    %117 = vmatpush1.msra.mxu0 %v89
    %118 = vmatprep.subr.mxu0 0.0
    %119 = vmatpush1.msra.mxu0 %v90
    %120 = vmatprep.subr.mxu0 0.0
    %121 = vmatpush1.msra.mxu0 %v91
    %122 = vmatprep.subr.mxu0 0.0
    %123 = vmatpush1.msra.mxu0 %v92
    %124 = vmatprep.subr.mxu0 0.0
    %125 = vmatpush1.msra.mxu0 %v93
    %126 = vmatprep.subr.mxu0 0.0
    %127 = vmatpush1.msra.mxu0 %v94
    %128 = vmatprep.subr.mxu0 0.0
    %129 = vmatpush1.msra.mxu0 %v95
    %130 = vmatprep.subr.mxu0 0.0
    %131 = vmatpush1.msra.mxu0 %v96
    %132 = vmatprep.subr.mxu0 0.0
    %133 = vmatpush1.msra.mxu0 %v97
    %134 = vmatprep.subr.mxu0 0.0
    %135 = vmatpush1.msra.mxu0 %v98
    %136 = vmatprep.subr.mxu0 0.0
    %137 = vmatpush1.msra.mxu0 %v99
    %138 = vmatprep.subr.mxu0 0.0
    %139 = vmatpush1.msra.mxu0 %v100
    %140 = vmatprep.subr.mxu0 0.0
    %141 = vmatpush1.msra.mxu0 0.0
    %142 = vmatprep.subr.mxu0 0.0
    %143 = vmatpush1.msra.mxu0 0.0
    %144 = vmatprep.subr.mxu0 0.0
    %145 = vmatpush1.msra.mxu0 0.0
    %146 = vmatprep.subr.mxu0 0.0
    %147 = vmatpush1.msra.mxu0 0.0
    %148 = vmatprep.subr.mxu0 0.0
    %149 = vmatpush1.msra.mxu0 0.0
    %150 = vmatprep.subr.mxu0 0.0
    %151 = vmatpush1.msra.mxu0 0.0
    %152 = vmatprep.subr.mxu0 0.0
    %153 = vmatpush1.msra.mxu0 0.0
    %154 = vmatprep.subr.mxu0 0.0
    %155 = vmatpush1.msra.mxu0 0.0
    %156 = vmatprep.subr.mxu0 0.0
    %157 = vmatpush1.msra.mxu0 0.0
    %158 = vmatprep.subr.mxu0 0.0
    %159 = vmatpush1.msra.mxu0 0.0
    %160 = vmatprep.subr.mxu0 0.0
    %161 = vmatpush1.msra.mxu0 0.0
    %162 = vmatprep.subr.mxu0 0.0
    %163 = vmatpush1.msra.mxu0 0.0
    %164 = vmatprep.subr.mxu0 0.0
    %165 = vmatpush1.msra.mxu0 0.0
    %166 = vmatprep.subr.mxu0 0.0
    %167 = vmatpush1.msra.mxu0 0.0
    %168 = vmatprep.subr.mxu0 0.0
    %169 = vmatpush1.msra.mxu0 0.0
    %170 = vmatprep.subr.mxu0 0.0
    %171 = vmatpush1.msra.mxu0 0.0
    %172 = vmatprep.mubr.f32.mxu0 0.0
    %173 = vmatmul.mubr.f32.gmra.mrb[0].mxu0 %v84
    %v174 = vpop.f32.mrb[0].mxu0
    %v175 = vadd.f32 %v106, %v174
    %v176 = vpop.f32.mrb[0].mxu0
    %177 = vdwg.mxu0
    %v178 = vmax.f32 %v175, 0.0
    %v179 = vld [vmem:[#allocation8] sm:$0xff]
    %v180 = vld [vmem:[#allocation8 + $0x8] sm:$0xff]
    %v181 = vld [vmem:[#allocation8 + $0x10] sm:$0xff]
    %v182 = vld [vmem:[#allocation8 + $0x18] sm:$0xff]
    %v183 = vld [vmem:[#allocation8 + $0x20] sm:$0xff]
    %v184 = vld [vmem:[#allocation8 + $0x28] sm:$0xff]
    %v185 = vld [vmem:[#allocation8 + $0x30] sm:$0xff]
    %v186 = vld [vmem:[#allocation8 + $0x38] sm:$0xff]
    %v187 = vld [vmem:[#allocation8 + $0x40] sm:$0xff]
    %v188 = vld [vmem:[#allocation8 + $0x48] sm:$0xff]
    %v189 = vld [vmem:[#allocation8 + $0x50] sm:$0xff]
    %v190 = vld [vmem:[#allocation8 + $0x58] sm:$0xff]
    %v191 = vld [vmem:[#allocation8 + $0x60] sm:$0xff]
    %v192 = vld [vmem:[#allocation8 + $0x68] sm:$0xff]
    %v193 = vld [vmem:[#allocation8 + $0x70] sm:$0xff]
    %v194 = vld [vmem:[#allocation8 + $0x78] sm:$0xff]
    %v195 = vld [vmem:[%s5] sm:$0x1]
    %v197 = vlaneseq
    %v198 = vshrl.u32 %v197, 7
    %v199 = vsub.s32 0, %v198
    %v200 = vrot.slane %v195, %v199
    %202 = vmatprep.subr.mxu0 0.0
    %203 = vmatpush1.msra.mxu0 %v179
    %204 = vmatprep.subr.mxu0 0.0
    %205 = vmatpush1.msra.mxu0 %v180
    %206 = vmatprep.subr.mxu0 0.0
    %207 = vmatpush1.msra.mxu0 %v181
    %208 = vmatprep.subr.mxu0 0.0
    %209 = vmatpush1.msra.mxu0 %v182
    %210 = vmatprep.subr.mxu0 0.0
    %211 = vmatpush1.msra.mxu0 %v183
    %212 = vmatprep.subr.mxu0 0.0
    %213 = vmatpush1.msra.mxu0 %v184
    %214 = vmatprep.subr.mxu0 0.0
    %215 = vmatpush1.msra.mxu0 %v185
    %216 = vmatprep.subr.mxu0 0.0
    %217 = vmatpush1.msra.mxu0 %v186
    %218 = vmatprep.subr.mxu0 0.0
    %219 = vmatpush1.msra.mxu0 %v187
    %220 = vmatprep.subr.mxu0 0.0
    %221 = vmatpush1.msra.mxu0 %v188
    %222 = vmatprep.subr.mxu0 0.0
    %223 = vmatpush1.msra.mxu0 %v189
    %224 = vmatprep.subr.mxu0 0.0
    %225 = vmatpush1.msra.mxu0 %v190
    %226 = vmatprep.subr.mxu0 0.0
    %227 = vmatpush1.msra.mxu0 %v191
    %228 = vmatprep.subr.mxu0 0.0
    %229 = vmatpush1.msra.mxu0 %v192
    %230 = vmatprep.subr.mxu0 0.0
    %231 = vmatpush1.msra.mxu0 %v193
    %232 = vmatprep.subr.mxu0 0.0
    %233 = vmatpush1.msra.mxu0 %v194
    %234 = vmatprep.subr.mxu0 0.0
    %235 = vmatpush1.msra.mxu0 0.0
    %236 = vmatprep.subr.mxu0 0.0
    %237 = vmatpush1.msra.mxu0 0.0
    %238 = vmatprep.subr.mxu0 0.0
    %239 = vmatpush1.msra.mxu0 0.0
    %240 = vmatprep.subr.mxu0 0.0
    %241 = vmatpush1.msra.mxu0 0.0
    %242 = vmatprep.subr.mxu0 0.0
    %243 = vmatpush1.msra.mxu0 0.0
    %244 = vmatprep.subr.mxu0 0.0
    %245 = vmatpush1.msra.mxu0 0.0
    %246 = vmatprep.subr.mxu0 0.0
    %247 = vmatpush1.msra.mxu0 0.0
    %248 = vmatprep.subr.mxu0 0.0
    %249 = vmatpush1.msra.mxu0 0.0
    %250 = vmatprep.subr.mxu0 0.0
    %251 = vmatpush1.msra.mxu0 0.0
    %252 = vmatprep.subr.mxu0 0.0
    %253 = vmatpush1.msra.mxu0 0.0
    %254 = vmatprep.subr.mxu0 0.0
    %255 = vmatpush1.msra.mxu0 0.0
    %256 = vmatprep.subr.mxu0 0.0
    %257 = vmatpush1.msra.mxu0 0.0
    %258 = vmatprep.subr.mxu0 0.0
    %259 = vmatpush1.msra.mxu0 0.0
    %260 = vmatprep.subr.mxu0 0.0
    %261 = vmatpush1.msra.mxu0 0.0
    %262 = vmatprep.subr.mxu0 0.0
    %263 = vmatpush1.msra.mxu0 0.0
    %264 = vmatprep.subr.mxu0 0.0
    %265 = vmatpush1.msra.mxu0 0.0
    %266 = vmatprep.mubr.f32.mxu0 0.0
    %267 = vmatmul.mubr.f32.gmra.mrb[0].mxu0 %v178
    %v268 = vpop.f32.mrb[0].mxu0
    %v269 = vadd.f32 %v200, %v268
    %v270 = vpop.f32.mrb[0].mxu0
    %271 = vdwg.mxu0
    %v272 = vmax.f32 %v269, 0.0
    %v273 = vld [vmem:[%s6] sm:$0x1]
    %v275 = vlaneseq
    %v276 = vshrl.u32 %v275, 7
    %v277 = vsub.s32 0, %v276
    %v278 = vrot.slane %v273, %v277
    %v280 = vmul.f32 %v272, %v278
    %281 = vadd.xlane.f32.xlu0 %v280
    %v282 = vpop.xlane.xlu0 %281
    %v283 = vld [vmem:[%s7] sm:$0x1]
    %v285 = vlaneseq
    %v286 = vshrl.u32 %v285, 7
    %v287 = vsub.s32 0, %v286
    %v288 = vrot.slane %v283, %v287
    %v290 = vadd.f32 %v282, %v288
    %v291 = vxor.u32 %v290, 2147483648
    %v292 = vmul.f32 %v291, 1.442695
    %v293 = vpow.pop %v292
    %v294 = vadd.f32 %v293, 1.0
    %v295 = vrcp.pop %v294
    %v296 = vmul.f32 1.0, %v295
    %297 = vst [vmem:[#allocation10] sm:$0xff] %v296
    // Predicated region
    $region50: #{tpu_custom_call.1} parent=1 // pred_check
      _
    $region51: #{tpu_custom_call.1} parent=1 // pred_check_branch
      %299 = sbr.rel (0) target = $region53
    $region52: #{tpu_custom_call.1} parent=1 // pred_region
      %s301 = ssub.s32 128, 128
      %302 = vsyncadd [#allocation4], %s301
      %s304 = sshll.u32 [#allocation10], 4
      %s305 = int_to_ptr.vmem [resolvable:$true] %s304
      %307 = dma.vmem_to_hbm [thread:$0]  %s305, 128, %s8, [#allocation4]
    $region53: #{tpu_custom_call.1} parent=1 // pred_fallthru
      _
    // Predicated region
    $region54: #{tpu_custom_call.1} parent=1 // pred_check
      _
    $region55: #{tpu_custom_call.1} parent=1 // pred_check_branch
      %309 = sbr.rel (0) target = $region57
    $region56: #{tpu_custom_call.1} parent=1 // pred_region
      %310 = dma.done [#allocation4], 128
    $region57: #{tpu_custom_call.1} parent=1 // pred_fallthru
      _
    %311 = vsyncpa [#allocation3], 1
    %312 = vsyncpa [#allocation6], 1
    %313 = vsyncpa [#allocation9], 1
    %314 = vsyncpa [#allocation4], 1

</llo_original>
